<compile_context>
chip_gen: v6e
topology: v6e:2x2x1
jax: 0.10.0
libtpu: 0.0.40
codegen_flags: <defaults>
</compile_context>

<pallas_src>
import jax
import jax.numpy as jnp
from jax.experimental import pallas as pl
from jax.experimental.pallas import tpu as pltpu


def _round_up(x, m):
    return (x + m - 1) // m * m


def _pick_t_chunk(T, requested):
    """Chunk along T: must divide T and be a multiple of 8 (sublane rule) or equal T."""
    if requested >= T:
        return T
    tc = (requested // 8) * 8
    while tc >= 8:
        if T % tc == 0:
            return tc
        tc -= 8
    return T


def rnn_kernel(x_ref, wih_ref, whh_ref, b_ref, fcw_ref, fcb_ref, out_ref, h_ref):
    """One time-chunk of the recurrence.

    x_ref:   (B, Tt, D)  batch-first input chunk (grid axis 0 walks T in Tt blocks)
    wih_ref: (D, Hp)     W_ih^T, H padded to a lane multiple
    whh_ref: (Hp, Hp)    W_hh^T
    b_ref:   (1, Hp)     b_ih + b_hh folded
    fcw_ref: (Hp, Op)    fc.weight^T
    fcb_ref: (1, Op)     fc.bias
    out_ref: (B, Op)     fc(h_T); written only on the last grid step
    h_ref:   (B, Hp)     carried hidden state (VMEM scratch, persists across grid steps)
    """
    B, Tt, D = x_ref.shape
    Hp = whh_ref.shape[0]
    t_blk = pl.program_id(0)

    @pl.when(t_blk == 0)
    def _():
        h_ref[...] = jnp.zeros_like(h_ref)  # PyTorch default h_0 = 0

    # Hoisted, time-parallel input projection for this chunk: ONE MXU matmul, bias folded in.
    # (Padded H columns stay exactly zero: padded W/b columns are zero and tanh(0)=0.)
    x2 = x_ref[...].reshape(B * Tt, D)
    xw = (jnp.dot(x2, wih_ref[...], preferred_element_type=jnp.float32)
          + b_ref[...]).reshape(B, Tt, Hp)

    whh = whh_ref[...]  # hoist the recurrent weight load out of the serial loop
    h = h_ref[...]
    # Serial recurrence, statically unrolled over the (small) chunk only — the grid over
    # T-chunks is the outer loop, so code size stays bounded at large T.
    for t in range(Tt):
        h = jnp.tanh(xw[:, t, :] + jnp.dot(h, whh, preferred_element_type=jnp.float32))
    h_ref[...] = h

    @pl.when(t_blk == pl.num_programs(0) - 1)
    def _():
        out_ref[...] = (
            jnp.dot(h, fcw_ref[...], preferred_element_type=jnp.float32) + fcb_ref[...]
        ).astype(out_ref.dtype)


def prepare_params(params):
    """One-time weight prep: transpose, fold biases, pad H/O to lane multiples (D left as-is)."""
    w_ih, w_hh = params["w_ih"], params["w_hh"]
    fc_w, fc_b = params["fc_w"], params["fc_b"]
    H, D = w_ih.shape
    O = fc_w.shape[0]
    Hp, Op = _round_up(H, 128), _round_up(O, 128)

    def pad_to(a, shape):
        return jnp.pad(a, [(0, s - d) for s, d in zip(shape, a.shape)])

    prep = {
        "wih_t": pad_to(w_ih.T.astype(jnp.float32), (D, Hp)),                         # (D, Hp)
        "whh_t": pad_to(w_hh.T.astype(jnp.float32), (Hp, Hp)),                        # (Hp, Hp)
        "b": pad_to((params["b_ih"] + params["b_hh"]).reshape(1, H).astype(jnp.float32), (1, Hp)),
        "fcw_t": pad_to(fc_w.T.astype(jnp.float32), (Hp, Op)),                        # (Hp, Op)
        "fcb": pad_to(fc_b.reshape(1, O).astype(jnp.float32), (1, Op)),               # (1, Op)
    }
    dims = {"D": D, "H": H, "O": O, "Hp": Hp, "Op": Op}
    return prep, dims


def rnn_model_forward(x, prep, dims, *, t_chunk=8):
    """x: [B, T, D] float32 (batch_first, like PyTorch). Returns [B, O]."""
    B, T, D = x.shape
    assert D == dims["D"]
    Hp, Op, O = dims["Hp"], dims["Op"], dims["O"]
    Tt = _pick_t_chunk(T, t_chunk)
    grid = (T // Tt,)

    const = lambda t: (0, 0)  # weights: whole-array blocks, resident across the grid

    out_p = pl.pallas_call(
        rnn_kernel,
        out_shape=jax.ShapeDtypeStruct((B, Op), jnp.float32),
        grid_spec=pltpu.PrefetchScalarGridSpec(
            num_scalar_prefetch=0,
            grid=grid,
            in_specs=[
                pl.BlockSpec((B, Tt, D), lambda t: (0, t, 0)),   # streamed x chunks
                pl.BlockSpec((D, Hp), const),                    # W_ih^T
                pl.BlockSpec((Hp, Hp), const),                   # W_hh^T
                pl.BlockSpec((1, Hp), const),                    # fused bias
                pl.BlockSpec((Hp, Op), const),                   # fc.weight^T
                pl.BlockSpec((1, Op), const),                    # fc.bias
            ],
            out_specs=pl.BlockSpec((B, Op), const),
            scratch_shapes=[pltpu.VMEM((B, Hp), jnp.float32)],   # carried hidden state
        ),
        compiler_params=pltpu.CompilerParams(
            dimension_semantics=("arbitrary",),                  # serial recurrence over T
            vmem_limit_bytes=32 * 1024 * 1024,
        ),
    )(x.astype(jnp.float32), prep["wih_t"], prep["whh_t"], prep["b"],
      prep["fcw_t"], prep["fcb"])

    return out_p[:, :O]


def init_params(key, input_dim, hidden_dim, output_dim):
    """Deterministic synthetic params matching nn.RNN / nn.Linear shapes."""
    k = jax.random.split(key, 6)
    s = 1.0 / jnp.sqrt(hidden_dim)
    return {
        "w_ih": jax.random.uniform(k[0], (hidden_dim, input_dim), jnp.float32, -s, s),
        "w_hh": jax.random.uniform(k[1], (hidden_dim, hidden_dim), jnp.float32, -s, s),
        "b_ih": jax.random.uniform(k[2], (hidden_dim,), jnp.float32, -s, s),
        "b_hh": jax.random.uniform(k[3], (hidden_dim,), jnp.float32, -s, s),
        "fc_w": jax.random.uniform(k[4], (output_dim, hidden_dim), jnp.float32, -s, s),
        "fc_b": jax.random.uniform(k[5], (output_dim,), jnp.float32, -s, s),
    }


def rnn_model_reference(x, params):
    """Pure-JAX reference mirroring PyTorch semantics (for correctness check)."""
    B, T, D = x.shape
    H = params["w_ih"].shape[0]
    h = jnp.zeros((B, H), jnp.float32)
    for t in range(T):
        h = jnp.tanh(
            x[:, t, :] @ params["w_ih"].T + params["b_ih"]
            + h @ params["w_hh"].T + params["b_hh"]
        )
    return h @ params["fc_w"].T + params["fc_b"]


if __name__ == "__main__":
    B, T, D = 2, 16, 16   # T=16 with Tt=8 -> grid of 2 steps (exercises carried-h pipeline)
    H, O = 64, 1          # nn.RNN(hidden_size=64), nn.Linear(64, 1) defaults

    key = jax.random.PRNGKey(0)
    kx, kp = jax.random.split(key)
    x = jax.random.normal(kx, (B, T, D), jnp.float32)
    params = init_params(kp, D, H, O)

    prep, dims = prepare_params(params)          # one-time weight prep
    out = rnn_model_forward(x, prep, dims, t_chunk=8)
    out = jax.block_until_ready(out)

    ref = rnn_model_reference(x, params)
    assert out.shape == (B, O), out.shape
    assert jnp.allclose(out, ref, atol=1e-4, rtol=1e-4), (out, ref)

    print("KERNEL_OK")
</pallas_src>

<mosaic_0001>
module attributes {stable_mosaic.version = 11 : i64} {
  func.func @rnn_kernel(%arg0: i32, %arg1: memref<2x8x16xf32, #tpu.memory_space<vmem>>, %arg2: memref<16x128xf32, #tpu.memory_space<vmem>>, %arg3: memref<128x128xf32, #tpu.memory_space<vmem>>, %arg4: memref<1x128xf32, #tpu.memory_space<vmem>>, %arg5: memref<128x128xf32, #tpu.memory_space<vmem>>, %arg6: memref<1x128xf32, #tpu.memory_space<vmem>>, %arg7: memref<2x128xf32, #tpu.memory_space<vmem>>, %arg8: memref<2x128xf32, #tpu.memory_space<vmem>>) attributes {dimension_semantics = [#tpu.dimension_semantics<arbitrary>], iteration_bounds = array<i64: 2>, scalar_prefetch = 0 : i64, scratch_operands = 1 : i64, tpu.core_type = #tpu.core_type<tc>, window_params = [{transform_indices = @transform_0, window_bounds = array<i64: 2, 8, 16>}, {pipeline_mode = #tpu.pipeline_mode<synchronous>, transform_indices = @transform_1, window_bounds = array<i64: 16, 128>}, {pipeline_mode = #tpu.pipeline_mode<synchronous>, transform_indices = @transform_2, window_bounds = array<i64: 128, 128>}, {pipeline_mode = #tpu.pipeline_mode<synchronous>, transform_indices = @transform_3, window_bounds = array<i64: 1, 128>}, {pipeline_mode = #tpu.pipeline_mode<synchronous>, transform_indices = @transform_4, window_bounds = array<i64: 128, 128>}, {pipeline_mode = #tpu.pipeline_mode<synchronous>, transform_indices = @transform_5, window_bounds = array<i64: 1, 128>}, {pipeline_mode = #tpu.pipeline_mode<synchronous>, transform_indices = @transform_6, window_bounds = array<i64: 2, 128>}]} {
    %c0_i32 = arith.constant 0 : i32
    %0 = arith.cmpi eq, %arg0, %c0_i32 : i32
    %1 = arith.extui %0 : i1 to i32
    %c0_i32_0 = arith.constant 0 : i32
    %2 = arith.cmpi ne, %1, %c0_i32_0 : i32
    scf.if %2 {
      %cst_22 = arith.constant 0.000000e+00 : f32
      %57 = vector.broadcast %cst_22 : f32 to vector<2x128xf32>
      %c0_23 = arith.constant 0 : index
      %c0_24 = arith.constant 0 : index
      %58 = vector.load %arg8[%c0_23, %c0_24] : memref<2x128xf32, #tpu.memory_space<vmem>>, vector<2x128xf32>
      tpu.vector_store %arg8[%c0_23, %c0_24], %57 {strides = array<i32>} : memref<2x128xf32, #tpu.memory_space<vmem>>, vector<2x128xf32>,
    } else {
    }
    %c0 = arith.constant 0 : index
    %c0_1 = arith.constant 0 : index
    %c0_2 = arith.constant 0 : index
    %3 = vector.load %arg1[%c0, %c0_1, %c0_2] : memref<2x8x16xf32, #tpu.memory_space<vmem>>, vector<2x8x16xf32>
    %4 = vector.shape_cast %3 : vector<2x8x16xf32> to vector<16x16xf32>
    %c0_3 = arith.constant 0 : index
    %c0_4 = arith.constant 0 : index
    %5 = vector.load %arg2[%c0_3, %c0_4] : memref<16x128xf32, #tpu.memory_space<vmem>>, vector<16x128xf32>
    %cst = arith.constant dense<0.000000e+00> : vector<16x128xf32>
    %6 = tpu.matmul %4, %5, %cst {dimension_numbers = #tpu.dot_dimension_numbers<[1], [0], [0], [1], [0, 0, 1, 1], [], []>} : vector<16x16xf32>, vector<16x128xf32>, vector<16x128xf32> -> vector<16x128xf32>
    %c0_5 = arith.constant 0 : index
    %c0_6 = arith.constant 0 : index
    %7 = vector.load %arg4[%c0_5, %c0_6] : memref<1x128xf32, #tpu.memory_space<vmem>>, vector<1x128xf32>
    %8 = vector.broadcast %7 : vector<1x128xf32> to vector<16x128xf32>
    %9 = arith.addf %6, %8 : vector<16x128xf32>
    %10 = vector.shape_cast %9 : vector<16x128xf32> to vector<2x8x128xf32>
    %c0_7 = arith.constant 0 : index
    %c0_8 = arith.constant 0 : index
    %11 = vector.load %arg3[%c0_7, %c0_8] : memref<128x128xf32, #tpu.memory_space<vmem>>, vector<128x128xf32>
    %c0_9 = arith.constant 0 : index
    %c0_10 = arith.constant 0 : index
    %12 = vector.load %arg8[%c0_9, %c0_10] : memref<2x128xf32, #tpu.memory_space<vmem>>, vector<2x128xf32>
    %13 = vector.extract_strided_slice %10 {offsets = [0, 0, 0], sizes = [2, 1, 128], strides = [1, 1, 1]} : vector<2x8x128xf32> to vector<2x1x128xf32>
    %14 = vector.shape_cast %13 : vector<2x1x128xf32> to vector<2x128xf32>
    %cst_11 = arith.constant dense<0.000000e+00> : vector<2x128xf32>
    %15 = tpu.matmul %12, %11, %cst_11 {dimension_numbers = #tpu.dot_dimension_numbers<[1], [0], [0], [1], [0, 0, 1, 1], [], []>} : vector<2x128xf32>, vector<128x128xf32>, vector<2x128xf32> -> vector<2x128xf32>
    %16 = arith.addf %14, %15 : vector<2x128xf32>
    %17 = math.tanh %16 : vector<2x128xf32>
    %18 = vector.extract_strided_slice %10 {offsets = [0, 1, 0], sizes = [2, 1, 128], strides = [1, 1, 1]} : vector<2x8x128xf32> to vector<2x1x128xf32>
    %19 = vector.shape_cast %18 : vector<2x1x128xf32> to vector<2x128xf32>
    %cst_12 = arith.constant dense<0.000000e+00> : vector<2x128xf32>
    %20 = tpu.matmul %17, %11, %cst_12 {dimension_numbers = #tpu.dot_dimension_numbers<[1], [0], [0], [1], [0, 0, 1, 1], [], []>} : vector<2x128xf32>, vector<128x128xf32>, vector<2x128xf32> -> vector<2x128xf32>
    %21 = arith.addf %19, %20 : vector<2x128xf32>
    %22 = math.tanh %21 : vector<2x128xf32>
    %23 = vector.extract_strided_slice %10 {offsets = [0, 2, 0], sizes = [2, 1, 128], strides = [1, 1, 1]} : vector<2x8x128xf32> to vector<2x1x128xf32>
    %24 = vector.shape_cast %23 : vector<2x1x128xf32> to vector<2x128xf32>
    %cst_13 = arith.constant dense<0.000000e+00> : vector<2x128xf32>
    %25 = tpu.matmul %22, %11, %cst_13 {dimension_numbers = #tpu.dot_dimension_numbers<[1], [0], [0], [1], [0, 0, 1, 1], [], []>} : vector<2x128xf32>, vector<128x128xf32>, vector<2x128xf32> -> vector<2x128xf32>
    %26 = arith.addf %24, %25 : vector<2x128xf32>
    %27 = math.tanh %26 : vector<2x128xf32>
    %28 = vector.extract_strided_slice %10 {offsets = [0, 3, 0], sizes = [2, 1, 128], strides = [1, 1, 1]} : vector<2x8x128xf32> to vector<2x1x128xf32>
    %29 = vector.shape_cast %28 : vector<2x1x128xf32> to vector<2x128xf32>
    %cst_14 = arith.constant dense<0.000000e+00> : vector<2x128xf32>
    %30 = tpu.matmul %27, %11, %cst_14 {dimension_numbers = #tpu.dot_dimension_numbers<[1], [0], [0], [1], [0, 0, 1, 1], [], []>} : vector<2x128xf32>, vector<128x128xf32>, vector<2x128xf32> -> vector<2x128xf32>
    %31 = arith.addf %29, %30 : vector<2x128xf32>
    %32 = math.tanh %31 : vector<2x128xf32>
    %33 = vector.extract_strided_slice %10 {offsets = [0, 4, 0], sizes = [2, 1, 128], strides = [1, 1, 1]} : vector<2x8x128xf32> to vector<2x1x128xf32>
    %34 = vector.shape_cast %33 : vector<2x1x128xf32> to vector<2x128xf32>
    %cst_15 = arith.constant dense<0.000000e+00> : vector<2x128xf32>
    %35 = tpu.matmul %32, %11, %cst_15 {dimension_numbers = #tpu.dot_dimension_numbers<[1], [0], [0], [1], [0, 0, 1, 1], [], []>} : vector<2x128xf32>, vector<128x128xf32>, vector<2x128xf32> -> vector<2x128xf32>
    %36 = arith.addf %34, %35 : vector<2x128xf32>
    %37 = math.tanh %36 : vector<2x128xf32>
    %38 = vector.extract_strided_slice %10 {offsets = [0, 5, 0], sizes = [2, 1, 128], strides = [1, 1, 1]} : vector<2x8x128xf32> to vector<2x1x128xf32>
    %39 = vector.shape_cast %38 : vector<2x1x128xf32> to vector<2x128xf32>
    %cst_16 = arith.constant dense<0.000000e+00> : vector<2x128xf32>
    %40 = tpu.matmul %37, %11, %cst_16 {dimension_numbers = #tpu.dot_dimension_numbers<[1], [0], [0], [1], [0, 0, 1, 1], [], []>} : vector<2x128xf32>, vector<128x128xf32>, vector<2x128xf32> -> vector<2x128xf32>
    %41 = arith.addf %39, %40 : vector<2x128xf32>
    %42 = math.tanh %41 : vector<2x128xf32>
    %43 = vector.extract_strided_slice %10 {offsets = [0, 6, 0], sizes = [2, 1, 128], strides = [1, 1, 1]} : vector<2x8x128xf32> to vector<2x1x128xf32>
    %44 = vector.shape_cast %43 : vector<2x1x128xf32> to vector<2x128xf32>
    %cst_17 = arith.constant dense<0.000000e+00> : vector<2x128xf32>
    %45 = tpu.matmul %42, %11, %cst_17 {dimension_numbers = #tpu.dot_dimension_numbers<[1], [0], [0], [1], [0, 0, 1, 1], [], []>} : vector<2x128xf32>, vector<128x128xf32>, vector<2x128xf32> -> vector<2x128xf32>
    %46 = arith.addf %44, %45 : vector<2x128xf32>
    %47 = math.tanh %46 : vector<2x128xf32>
    %48 = vector.extract_strided_slice %10 {offsets = [0, 7, 0], sizes = [2, 1, 128], strides = [1, 1, 1]} : vector<2x8x128xf32> to vector<2x1x128xf32>
    %49 = vector.shape_cast %48 : vector<2x1x128xf32> to vector<2x128xf32>
    %cst_18 = arith.constant dense<0.000000e+00> : vector<2x128xf32>
    %50 = tpu.matmul %47, %11, %cst_18 {dimension_numbers = #tpu.dot_dimension_numbers<[1], [0], [0], [1], [0, 0, 1, 1], [], []>} : vector<2x128xf32>, vector<128x128xf32>, vector<2x128xf32> -> vector<2x128xf32>
    %51 = arith.addf %49, %50 : vector<2x128xf32>
    %52 = math.tanh %51 : vector<2x128xf32>
    %c0_19 = arith.constant 0 : index
    %c0_20 = arith.constant 0 : index
    %53 = vector.load %arg8[%c0_19, %c0_20] : memref<2x128xf32, #tpu.memory_space<vmem>>, vector<2x128xf32>
    tpu.vector_store %arg8[%c0_19, %c0_20], %52 {strides = array<i32>} : memref<2x128xf32, #tpu.memory_space<vmem>>, vector<2x128xf32>,
    %c1_i32 = arith.constant 1 : i32
    %54 = arith.cmpi eq, %arg0, %c1_i32 : i32
    %55 = arith.extui %54 : i1 to i32
    %c0_i32_21 = arith.constant 0 : i32
    %56 = arith.cmpi ne, %55, %c0_i32_21 : i32
    scf.if %56 {
      %c0_22 = arith.constant 0 : index
      %c0_23 = arith.constant 0 : index
      %57 = vector.load %arg5[%c0_22, %c0_23] : memref<128x128xf32, #tpu.memory_space<vmem>>, vector<128x128xf32>
      %cst_24 = arith.constant dense<0.000000e+00> : vector<2x128xf32>
      %58 = tpu.matmul %52, %57, %cst_24 {dimension_numbers = #tpu.dot_dimension_numbers<[1], [0], [0], [1], [0, 0, 1, 1], [], []>} : vector<2x128xf32>, vector<128x128xf32>, vector<2x128xf32> -> vector<2x128xf32>
      %c0_25 = arith.constant 0 : index
      %c0_26 = arith.constant 0 : index
      %59 = vector.load %arg6[%c0_25, %c0_26] : memref<1x128xf32, #tpu.memory_space<vmem>>, vector<1x128xf32>
      %60 = vector.broadcast %59 : vector<1x128xf32> to vector<2x128xf32>
      %61 = arith.addf %58, %60 : vector<2x128xf32>
      %c0_27 = arith.constant 0 : index
      %c0_28 = arith.constant 0 : index
      %62 = vector.load %arg7[%c0_27, %c0_28] : memref<2x128xf32, #tpu.memory_space<vmem>>, vector<2x128xf32>
      tpu.vector_store %arg7[%c0_27, %c0_28], %61 {strides = array<i32>} : memref<2x128xf32, #tpu.memory_space<vmem>>, vector<2x128xf32>,
    } else {
    }
    return
  }
  func.func @transform_0(%arg0: i32) -> (i32, i32, i32) {
    %c0_i32 = arith.constant 0 : i32
    %c0_i32_0 = arith.constant 0 : i32
    %c0_i32_1 = arith.constant 0 : i32
    return %c0_i32, %arg0, %c0_i32_0 : i32, i32, i32
  }
  func.func @transform_1(%arg0: i32) -> (i32, i32) {
    %c0_i32 = arith.constant 0 : i32
    %c0_i32_0 = arith.constant 0 : i32
    %c0_i32_1 = arith.constant 0 : i32
    return %c0_i32, %c0_i32_0 : i32, i32
  }
  func.func @transform_2(%arg0: i32) -> (i32, i32) {
    %c0_i32 = arith.constant 0 : i32
    %c0_i32_0 = arith.constant 0 : i32
    %c0_i32_1 = arith.constant 0 : i32
    return %c0_i32, %c0_i32_0 : i32, i32
  }
  func.func @transform_3(%arg0: i32) -> (i32, i32) {
    %c0_i32 = arith.constant 0 : i32
    %c0_i32_0 = arith.constant 0 : i32
    %c0_i32_1 = arith.constant 0 : i32
    return %c0_i32, %c0_i32_0 : i32, i32
  }
  func.func @transform_4(%arg0: i32) -> (i32, i32) {
    %c0_i32 = arith.constant 0 : i32
    %c0_i32_0 = arith.constant 0 : i32
    %c0_i32_1 = arith.constant 0 : i32
    return %c0_i32, %c0_i32_0 : i32, i32
  }
  func.func @transform_5(%arg0: i32) -> (i32, i32) {
    %c0_i32 = arith.constant 0 : i32
    %c0_i32_0 = arith.constant 0 : i32
    %c0_i32_1 = arith.constant 0 : i32
    return %c0_i32, %c0_i32_0 : i32, i32
  }
  func.func @transform_6(%arg0: i32) -> (i32, i32) {
    %c0_i32 = arith.constant 0 : i32
    %c0_i32_0 = arith.constant 0 : i32
    %c0_i32_1 = arith.constant 0 : i32
    return %c0_i32, %c0_i32_0 : i32, i32
  }
}

</mosaic_0001>

<llo_original>
// kernel: tpu_custom_call.1
$region0: #{tpu_custom_call.1}
  #allocation0 [shape = 'u32[]', space=smem, size = 0x4, offset = 0x4, fixed_abs, tag = 'smem constant byte address 0x4 - core index']
  #allocation1 [shape = 'u32[144,128]{1,0:T(1,128)}', space=vmem, size = 0x12000, scoped, tag = 'internal scratch']
  #allocation2 [shape = 'f32[2,128]{1,0:T(2,128)}', space=vmem, size = 0x400, scoped, tag = 'scratch operand']
  %s0 = inlined_call_operand.hbm [shape: f32[2,16,16], index: 0, kind: input, shape index: {}]
  %s1 = inlined_call_operand.hbm [shape: f32[16,128], index: 1, kind: input, shape index: {}]
  %s2 = inlined_call_operand.hbm [shape: f32[128,128], index: 2, kind: input, shape index: {}]
  %s3 = inlined_call_operand.vmem [shape: f32[1,128], index: 3, kind: input, shape index: {}]
  %s4 = inlined_call_operand.hbm [shape: f32[128,128], index: 4, kind: input, shape index: {}]
  %s5 = inlined_call_operand.vmem [shape: f32[1,128], index: 5, kind: input, shape index: {}]
  %s6 = inlined_call_operand.hbm [shape: f32[2,128], index: 6, kind: output, shape index: {}]
  %s7 = sld [smem:[#allocation0]]
  $region81: #{tpu_custom_call.1} parent=0
    _
  %s9 = ssub.s32 1, %s7
  %s10 = scalar_select 0, %s9, %s7
  $region1: #{tpu_custom_call.1} parent=0
    #allocation3 [shape = 'u8[16384]{0}', space=vmem, size = 0x4000, scoped, tag = 'input window, operand 0']
    #allocation4 [shape = 's32[2]{0}', space=sflag, size = 0x8, scoped, tag = 'scoped memory for tpu_custom_call.1']
    #allocation5 [shape = 's32[2]{0}', space=sflag, size = 0x8, scoped, tag = 'scoped memory for tpu_custom_call.1']
    #allocation6 [shape = 'u8[8192]{0}', space=vmem, size = 0x2000, scoped, tag = 'input window, operand 1, single buffered']
    #allocation7 [shape = 's32[1]{0}', space=sflag, size = 0x4, scoped, tag = 'scoped memory for tpu_custom_call.1']
    #allocation8 [shape = 'u8[65536]{0}', space=vmem, size = 0x10000, scoped, tag = 'input window, operand 2, single buffered']
    #allocation9 [shape = 'u8[65536]{0}', space=vmem, size = 0x10000, scoped, tag = 'input window, operand 4, single buffered']
    #allocation10 [shape = 's32[1]{0}', space=sflag, size = 0x4, scoped, tag = 'scoped memory for tpu_custom_call.1']
    #allocation11 [shape = 'u8[1024]{0}', space=vmem, size = 0x400, scoped, tag = 'output window, operand 0, single buffered']
    %11 = vsyncpa [#allocation4], 0
    %s12 = scalar_lea.sflag [#allocation4], 1
    %13 = vsyncpa %s12, 0
    %14 = vsyncpa [#allocation7], 0
    %15 = vsyncpa [#allocation10], 0
    %16 = vsyncpa [#allocation5], 0
    loop: start=0, step=1, limit=4
    $region2: #{tpu_custom_call.1} parent=1 // loop_pre_header
      _
    $region3: #{tpu_custom_call.1} parent=1 // loop_header
      %s18 = sphi 0, %s22
      %p19 = scmp.ge.s32.totalorder %s18, 4
      %s28 = sphi 0, %s30
      %s31 = sphi 0, %s28
      %s32 = sphi 0, %s31
      %s48 = sphi 0, %s32
      %s52 = sphi 0, %s52
      %s54 = sphi 0, %s52
      %s55 = sphi 0, %s54
      %s69 = sphi 0, %s55
      %s73 = sphi 0, %s73
      %s75 = sphi 0, %s73
      %s76 = sphi 0, %s75
      %s90 = sphi 0, %s76
      %s94 = sphi 0, %s94
      %s96 = sphi 0, %s94
      %s97 = sphi 0, %s96
      %s111 = sphi 0, %s97
      %s115 = sphi 0, %s115
      %s117 = sphi 0, %s115
      %s118 = sphi 0, %s117
      %s132 = sphi 0, %s118
      %s136 = sphi 0, %s136
      %s138 = sphi 0, %s136
      %s139 = sphi 0, %s138
      %s153 = sphi 0, %s139
      %s157 = sphi 0, %s157
      %s159 = sphi 0, %s157
      %s160 = sphi 0, %s159
      %s174 = sphi 0, %s160
    $region4: #{tpu_custom_call.1} parent=1 // loop_header_branch
      %21 = sbr.rel (%p19) target = $region8
    $region5: #{tpu_custom_call.1} parent=1 // loop_body
      %s23 = ssub.s32 %s18, 1
      %s24 = ssub.s32 %s18, 2
      %s25 = sadd.s32 %s18, 1
      %s26 = ssub.s32 %s18, %s25
      %p27 = scmp.eq.s32.totalorder %s26, 0
      %s29 = sadd.s32 %s28, 1
      %s30 = scalar_select %p27, %s28, %s29
      %p33 = pneg %p27
      %p34 = scmp.eq.s32.totalorder %s18, 1
      %p35 = por %p33, %p34
      %p36 = scmp.ne.s32.totalorder %s28, %s31
      %p37 = scmp.eq.s32.totalorder %s18, 0
      %p38 = por %p36, %p37
      %p39 = scmp.ne.s32.totalorder %s28, %s31
      %p40 = scmp.eq.s32.totalorder %s23, 1
      %p41 = por %p39, %p40
      %p42 = scmp.ne.s32.totalorder %s31, %s32
      %p43 = scmp.eq.s32.totalorder %s23, 0
      %p44 = por %p42, %p43
      %p45 = scmp.ne.s32.totalorder %s31, %s32
      %p46 = scmp.eq.s32.totalorder %s24, 1
      %p47 = por %p45, %p46
      %p49 = scmp.ne.s32.totalorder %s32, %s48
      %p50 = scmp.eq.s32.totalorder %s24, 0
      %p51 = por %p49, %p50
      %s53 = sadd.s32 %s52, 1
      %p56 = scmp.eq.s32.totalorder %s18, 1
      %p57 = scmp.ne.s32.totalorder %s52, %s54
      %p58 = scmp.eq.s32.totalorder %s18, 0
      %p59 = por %p57, %p58
      %p60 = scmp.ne.s32.totalorder %s52, %s54
      %p61 = scmp.eq.s32.totalorder %s23, 1
      %p62 = por %p60, %p61
      %p63 = scmp.ne.s32.totalorder %s54, %s55
      %p64 = scmp.eq.s32.totalorder %s23, 0
      %p65 = por %p63, %p64
      %p66 = scmp.ne.s32.totalorder %s54, %s55
      %p67 = scmp.eq.s32.totalorder %s24, 1
      %p68 = por %p66, %p67
      %p70 = scmp.ne.s32.totalorder %s55, %s69
      %p71 = scmp.eq.s32.totalorder %s24, 0
      %p72 = por %p70, %p71
      %s74 = sadd.s32 %s73, 1
      %p77 = scmp.eq.s32.totalorder %s18, 1
      %p78 = scmp.ne.s32.totalorder %s73, %s75
      %p79 = scmp.eq.s32.totalorder %s18, 0
      %p80 = por %p78, %p79
      %p81 = scmp.ne.s32.totalorder %s73, %s75
      %p82 = scmp.eq.s32.totalorder %s23, 1
      %p83 = por %p81, %p82
      %p84 = scmp.ne.s32.totalorder %s75, %s76
      %p85 = scmp.eq.s32.totalorder %s23, 0
      %p86 = por %p84, %p85
      %p87 = scmp.ne.s32.totalorder %s75, %s76
      %p88 = scmp.eq.s32.totalorder %s24, 1
      %p89 = por %p87, %p88
      %p91 = scmp.ne.s32.totalorder %s76, %s90
      %p92 = scmp.eq.s32.totalorder %s24, 0
      %p93 = por %p91, %p92
      %s95 = sadd.s32 %s94, 1
      %p98 = scmp.eq.s32.totalorder %s18, 1
      %p99 = scmp.ne.s32.totalorder %s94, %s96
      %p100 = scmp.eq.s32.totalorder %s18, 0
      %p101 = por %p99, %p100
      %p102 = scmp.ne.s32.totalorder %s94, %s96
      %p103 = scmp.eq.s32.totalorder %s23, 1
      %p104 = por %p102, %p103
      %p105 = scmp.ne.s32.totalorder %s96, %s97
      %p106 = scmp.eq.s32.totalorder %s23, 0
      %p107 = por %p105, %p106
      %p108 = scmp.ne.s32.totalorder %s96, %s97
      %p109 = scmp.eq.s32.totalorder %s24, 1
      %p110 = por %p108, %p109
      %p112 = scmp.ne.s32.totalorder %s97, %s111
      %p113 = scmp.eq.s32.totalorder %s24, 0
      %p114 = por %p112, %p113
      %s116 = sadd.s32 %s115, 1
      %p119 = scmp.eq.s32.totalorder %s18, 1
      %p120 = scmp.ne.s32.totalorder %s115, %s117
      %p121 = scmp.eq.s32.totalorder %s18, 0
      %p122 = por %p120, %p121
      %p123 = scmp.ne.s32.totalorder %s115, %s117
      %p124 = scmp.eq.s32.totalorder %s23, 1
      %p125 = por %p123, %p124
      %p126 = scmp.ne.s32.totalorder %s117, %s118
      %p127 = scmp.eq.s32.totalorder %s23, 0
      %p128 = por %p126, %p127
      %p129 = scmp.ne.s32.totalorder %s117, %s118
      %p130 = scmp.eq.s32.totalorder %s24, 1
      %p131 = por %p129, %p130
      %p133 = scmp.ne.s32.totalorder %s118, %s132
      %p134 = scmp.eq.s32.totalorder %s24, 0
      %p135 = por %p133, %p134
      %s137 = sadd.s32 %s136, 1
      %p140 = scmp.eq.s32.totalorder %s18, 1
      %p141 = scmp.ne.s32.totalorder %s136, %s138
      %p142 = scmp.eq.s32.totalorder %s18, 0
      %p143 = por %p141, %p142
      %p144 = scmp.ne.s32.totalorder %s136, %s138
      %p145 = scmp.eq.s32.totalorder %s23, 1
      %p146 = por %p144, %p145
      %p147 = scmp.ne.s32.totalorder %s138, %s139
      %p148 = scmp.eq.s32.totalorder %s23, 0
      %p149 = por %p147, %p148
      %p150 = scmp.ne.s32.totalorder %s138, %s139
      %p151 = scmp.eq.s32.totalorder %s24, 1
      %p152 = por %p150, %p151
      %p154 = scmp.ne.s32.totalorder %s139, %s153
      %p155 = scmp.eq.s32.totalorder %s24, 0
      %p156 = por %p154, %p155
      %s158 = sadd.s32 %s157, 1
      %p161 = scmp.eq.s32.totalorder %s18, 1
      %p162 = scmp.ne.s32.totalorder %s157, %s159
      %p163 = scmp.eq.s32.totalorder %s18, 0
      %p164 = por %p162, %p163
      %p165 = scmp.ne.s32.totalorder %s157, %s159
      %p166 = scmp.eq.s32.totalorder %s23, 1
      %p167 = por %p165, %p166
      %p168 = scmp.ne.s32.totalorder %s159, %s160
      %p169 = scmp.eq.s32.totalorder %s23, 0
      %p170 = por %p168, %p169
      %p171 = scmp.ne.s32.totalorder %s159, %s160
      %p172 = scmp.eq.s32.totalorder %s24, 1
      %p173 = por %p171, %p172
      %p175 = scmp.ne.s32.totalorder %s160, %s174
      %p176 = scmp.eq.s32.totalorder %s24, 0
      %p177 = por %p175, %p176
      %p178 = scmp.le.s32.totalorder 1, %s18
      %p179 = scmp.lt.s32.totalorder %s18, 3
      %p180 = pnand %p178, %p179
      %p181 = pneg %p180
      // Predicated region
      $region9: #{tpu_custom_call.1} parent=5 // pred_check
        _
      $region10: #{tpu_custom_call.1} parent=5 // pred_check_branch
        %183 = sbr.rel (%p180) target = $region12
      $region11: #{tpu_custom_call.1} parent=5 // pred_region
        %s184 = ssub.s32 %s18, 1
        // Predicated region
        $region13: #{tpu_custom_call.1} parent=11 // pred_check
          %p185 = pneg %p65
        $region14: #{tpu_custom_call.1} parent=11 // pred_check_branch
          %187 = sbr.rel (%p185) target = $region16
        $region15: #{tpu_custom_call.1} parent=11 // pred_region
          %s189 = ssub.s32 256, 256
          %190 = vsyncadd [#allocation7], %s189
          %s191 = sshll.u32 [#allocation6], 4
          %s192 = int_to_ptr.vmem [resolvable:$true] %s191
          %197 = dma.hbm_to_vmem [thread:$0]  %s1, 256, %s192, [#allocation7], 128, 128, 8
        $region16: #{tpu_custom_call.1} parent=11 // pred_fallthru
          _
        // Predicated region
        $region17: #{tpu_custom_call.1} parent=11 // pred_check
          %p198 = pneg %p86
        $region18: #{tpu_custom_call.1} parent=11 // pred_check_branch
          %200 = sbr.rel (%p198) target = $region20
        $region19: #{tpu_custom_call.1} parent=11 // pred_region
          %s202 = ssub.s32 2048, 2048
          %203 = vsyncadd [#allocation7], %s202
          %s204 = sshll.u32 [#allocation8], 4
          %s205 = int_to_ptr.vmem [resolvable:$true] %s204
          %210 = dma.hbm_to_vmem [thread:$0]  %s2, 2048, %s205, [#allocation7], 128, 128, 8
        $region20: #{tpu_custom_call.1} parent=11 // pred_fallthru
          _
        // Predicated region
        $region21: #{tpu_custom_call.1} parent=11 // pred_check
          %p211 = pneg %p107
        $region22: #{tpu_custom_call.1} parent=11 // pred_check_branch
          %213 = sbr.rel (%p211) target = $region24
        $region23: #{tpu_custom_call.1} parent=11 // pred_region
          _
        $region24: #{tpu_custom_call.1} parent=11 // pred_fallthru
          _
        // Predicated region
        $region25: #{tpu_custom_call.1} parent=11 // pred_check
          %p214 = pneg %p128
        $region26: #{tpu_custom_call.1} parent=11 // pred_check_branch
          %216 = sbr.rel (%p214) target = $region28
        $region27: #{tpu_custom_call.1} parent=11 // pred_region
          %s218 = ssub.s32 2048, 2048
          %219 = vsyncadd [#allocation10], %s218
          %s220 = sshll.u32 [#allocation9], 4
          %s221 = int_to_ptr.vmem [resolvable:$true] %s220
          %226 = dma.hbm_to_vmem [thread:$0]  %s4, 2048, %s221, [#allocation10], 128, 128, 8
        $region28: #{tpu_custom_call.1} parent=11 // pred_fallthru
          _
        // Predicated region
        $region29: #{tpu_custom_call.1} parent=11 // pred_check
          %p227 = pneg %p149
        $region30: #{tpu_custom_call.1} parent=11 // pred_check_branch
          %229 = sbr.rel (%p227) target = $region32
        $region31: #{tpu_custom_call.1} parent=11 // pred_region
          _
        $region32: #{tpu_custom_call.1} parent=11 // pred_fallthru
          _
      $region12: #{tpu_custom_call.1} parent=5 // pred_fallthru
        _
      %p230 = scmp.lt.s32.totalorder %s18, 2
      // Predicated region
      $region33: #{tpu_custom_call.1} parent=5 // pred_check
        %p231 = pneg %p230
      $region34: #{tpu_custom_call.1} parent=5 // pred_check_branch
        %233 = sbr.rel (%p231) target = $region36
      $region35: #{tpu_custom_call.1} parent=5 // pred_region
        // Predicated region
        $region37: #{tpu_custom_call.1} parent=35 // pred_check
          %p234 = pneg %p38
        $region38: #{tpu_custom_call.1} parent=35 // pred_check_branch
          %236 = sbr.rel (%p234) target = $region40
        $region39: #{tpu_custom_call.1} parent=35 // pred_region
          %s237 = sand.u32 %s28, 1
          %s238 = scalar_lea.sflag [#allocation4], %s237
          %s239 = sand.u32 %s28, 1
          %s240 = smul.addr %s239, 16
          %s241 = scalar_lea.vmem [#allocation3], %s240
          %s243 = ssub.s32 256, 256
          %244 = vsyncadd %s238, %s243
          %s245 = smul.addr %s18, 128
          %s246 = scalar_lea.hbm %s0, %s245
          %s247 = sshll.u32 %s241, 4
          %s248 = int_to_ptr.vmem [resolvable:$true] %s247
          %253 = dma.hbm_to_vmem [thread:$0]  %s246, 256, %s248, %s238, 256, 128, 8
        $region40: #{tpu_custom_call.1} parent=35 // pred_fallthru
          _
      $region36: #{tpu_custom_call.1} parent=5 // pred_fallthru
        _
      %p254 = scmp.le.s32.totalorder 1, %s18
      %p255 = scmp.lt.s32.totalorder %s18, 3
      %p256 = pnand %p254, %p255
      %p257 = pneg %p256
      // Predicated region
      $region41: #{tpu_custom_call.1} parent=5 // pred_check
        _
      $region42: #{tpu_custom_call.1} parent=5 // pred_check_branch
        %259 = sbr.rel (%p256) target = $region44
      $region43: #{tpu_custom_call.1} parent=5 // pred_region
        %s260 = ssub.s32 %s18, 1
        %s261 = sand.u32 %s31, 1
        %s262 = scalar_lea.sflag [#allocation4], %s261
        %s263 = sand.u32 %s31, 1
        %s264 = smul.addr %s263, 16
        %s265 = scalar_lea.vmem [#allocation3], %s264
        // Predicated region
        $region45: #{tpu_custom_call.1} parent=43 // pred_check
          %p266 = pneg %p44
        $region46: #{tpu_custom_call.1} parent=43 // pred_check_branch
          %268 = sbr.rel (%p266) target = $region48
        $region47: #{tpu_custom_call.1} parent=43 // pred_region
          %269 = dma.done %s262, 256
        $region48: #{tpu_custom_call.1} parent=43 // pred_fallthru
          _
        // Predicated region
        $region49: #{tpu_custom_call.1} parent=43 // pred_check
          %p270 = pneg %p65
        $region50: #{tpu_custom_call.1} parent=43 // pred_check_branch
          %272 = sbr.rel (%p270) target = $region52
        $region51: #{tpu_custom_call.1} parent=43 // pred_region
          %273 = dma.done [#allocation7], 256
        $region52: #{tpu_custom_call.1} parent=43 // pred_fallthru
          _
        // Predicated region
        $region53: #{tpu_custom_call.1} parent=43 // pred_check
          %p274 = pneg %p86
        $region54: #{tpu_custom_call.1} parent=43 // pred_check_branch
          %276 = sbr.rel (%p274) target = $region56
        $region55: #{tpu_custom_call.1} parent=43 // pred_region
          %277 = dma.done [#allocation7], 2048
        $region56: #{tpu_custom_call.1} parent=43 // pred_fallthru
          _
        // Predicated region
        $region57: #{tpu_custom_call.1} parent=43 // pred_check
          %p278 = pneg %p128
        $region58: #{tpu_custom_call.1} parent=43 // pred_check_branch
          %280 = sbr.rel (%p278) target = $region60
        $region59: #{tpu_custom_call.1} parent=43 // pred_region
          %281 = dma.done [#allocation10], 2048
        $region60: #{tpu_custom_call.1} parent=43 // pred_fallthru
          _
        %s282 = sand.u32 %s31, 1
        %s283 = scalar_lea.sflag [#allocation4], %s282
        %s284 = sand.u32 %s31, 1
        %s285 = smul.addr %s284, 16
        %s286 = scalar_lea.vmem [#allocation3], %s285
        %p287 = pneg %p44
        %p288 = pneg %p41
        %p289 = pneg %p65
        %p290 = pneg %p62
        %p291 = pneg %p86
        %p292 = pneg %p83
        %p293 = pneg %p107
        %p294 = pneg %p104
        %p295 = pneg %p128
        %p296 = pneg %p125
        %p297 = pneg %p149
        %p298 = pneg %p146
        %p299 = pneg %p170
        %p300 = pneg %p167
        %p301 = scmp.eq.s32.totalorder %s23, 0
        // Predicated region
        $region61: #{tpu_custom_call.1} parent=43 // pred_check
          %p302 = pneg %p301
        $region62: #{tpu_custom_call.1} parent=43 // pred_check_branch
          %304 = sbr.rel (%p302) target = $region64
        $region63: #{tpu_custom_call.1} parent=43 // pred_region
          %305 = vst [vmem:[#allocation2] sm:$0x3] 0.0
        $region64: #{tpu_custom_call.1} parent=43 // pred_fallthru
          _
        %v306 = vld [vmem:[%s265] sm:$0xff]
        %v307 = vld [vmem:[%s265 + $0x8] sm:$0xff]
        %v308 = vld [vmem:[#allocation6] sm:$0xff]
        %v309 = vld [vmem:[#allocation6 + $0x8] sm:$0xff]
        %v310 = vld [vmem:[%s3] sm:$0x1]
        %v312 = vlaneseq
        %v313 = vshrl.u32 %v312, 7
        %v314 = vsub.s32 0, %v313
        %v315 = vrot.slane %v310, %v314
        %vm317 = vcmask 130048
        %v319 = vsel %vm317, %v306, 0
        %v322 = vsel %vm317, %v307, 0
        %324 = vmatprep.subr.mxu0 0.0
        %325 = vmatpush1.msra.mxu0 0.0
        %326 = vmatprep.subr.mxu0 0.0
        %327 = vmatpush1.msra.mxu0 0.0
        %328 = vmatprep.subr.mxu0 0.0
        %329 = vmatpush1.msra.mxu0 0.0
        %330 = vmatprep.subr.mxu0 0.0
        %331 = vmatpush1.msra.mxu0 0.0
        %332 = vmatprep.subr.mxu0 0.0
        %333 = vmatpush1.msra.mxu0 0.0
        %334 = vmatprep.subr.mxu0 0.0
        %335 = vmatpush1.msra.mxu0 0.0
        %336 = vmatprep.subr.mxu0 0.0
        %337 = vmatpush1.msra.mxu0 0.0
        %338 = vmatprep.subr.mxu0 0.0
        %339 = vmatpush1.msra.mxu0 0.0
        %340 = vmatprep.subr.mxu0 0.0
        %341 = vmatpush1.msra.mxu0 0.0
        %342 = vmatprep.subr.mxu0 0.0
        %343 = vmatpush1.msra.mxu0 0.0
        %344 = vmatprep.subr.mxu0 0.0
        %345 = vmatpush1.msra.mxu0 0.0
        %346 = vmatprep.subr.mxu0 0.0
        %347 = vmatpush1.msra.mxu0 0.0
        %348 = vmatprep.subr.mxu0 0.0
        %349 = vmatpush1.msra.mxu0 0.0
        %350 = vmatprep.subr.mxu0 0.0
        %351 = vmatpush1.msra.mxu0 0.0
        %352 = vmatprep.subr.mxu0 0.0
        %353 = vmatpush1.msra.mxu0 %v309
        %354 = vmatprep.subr.mxu0 0.0
        %355 = vmatpush1.msra.mxu0 %v308
        %356 = vmatprep.subr.mxu0 0.0
        %357 = vmatpush2.msra.mxu0 0.0
        %358 = vmatprep.subr.mxu0 0.0
        %359 = vmatpush2.msra.mxu0 0.0
        %360 = vmatprep.subr.mxu0 0.0
        %361 = vmatpush2.msra.mxu0 0.0
        %362 = vmatprep.subr.mxu0 0.0
        %363 = vmatpush2.msra.mxu0 0.0
        %364 = vmatprep.subr.mxu0 0.0
        %365 = vmatpush2.msra.mxu0 0.0
        %366 = vmatprep.subr.mxu0 0.0
        %367 = vmatpush2.msra.mxu0 0.0
        %368 = vmatprep.subr.mxu0 0.0
        %369 = vmatpush2.msra.mxu0 0.0
        %370 = vmatprep.subr.mxu0 0.0
        %371 = vmatpush2.msra.mxu0 0.0
        %372 = vmatprep.subr.mxu0 0.0
        %373 = vmatpush2.msra.mxu0 0.0
        %374 = vmatprep.subr.mxu0 0.0
        %375 = vmatpush2.msra.mxu0 0.0
        %376 = vmatprep.subr.mxu0 0.0
        %377 = vmatpush2.msra.mxu0 0.0
        %378 = vmatprep.subr.mxu0 0.0
        %379 = vmatpush2.msra.mxu0 0.0
        %380 = vmatprep.subr.mxu0 0.0
        %381 = vmatpush2.msra.mxu0 0.0
        %382 = vmatprep.subr.mxu0 0.0
        %383 = vmatpush2.msra.mxu0 0.0
        %384 = vmatprep.subr.mxu0 0.0
        %385 = vmatpush2.msra.mxu0 0.0
        %386 = vmatprep.subr.mxu0 0.0
        %387 = vmatpush2.msra.mxu0 0.0
        %388 = vmatprep.mubr.f32.mxu0 0.0
        %389 = vmatmul.mubr.f32.gmra.mxu0 %v319
        %v390 = vpop.f32.mrf.mxu0
        %v391 = vadd.f32 %v315, %v390
        %v392 = vpop.f32.mrf.mxu0
        %393 = vmatprep.mubr.f32.mxu0 0.0
        %394 = vmatmul.mubr.f32.gmra.mxu0 %v322
        %v395 = vpop.f32.mrf.mxu0
        %v396 = vadd.f32 %v315, %v395
        %v397 = vpop.f32.mrf.mxu0
        %398 = vdwg.mxu0
        %v399 = vld [vmem:[#allocation8] sm:$0xff]
        %v400 = vld [vmem:[#allocation8 + $0x8] sm:$0xff]
        %v401 = vld [vmem:[#allocation8 + $0x10] sm:$0xff]
        %v402 = vld [vmem:[#allocation8 + $0x18] sm:$0xff]
        %v403 = vld [vmem:[#allocation8 + $0x20] sm:$0xff]
        %v404 = vld [vmem:[#allocation8 + $0x28] sm:$0xff]
        %v405 = vld [vmem:[#allocation8 + $0x30] sm:$0xff]
        %v406 = vld [vmem:[#allocation8 + $0x38] sm:$0xff]
        %v407 = vld [vmem:[#allocation8 + $0x40] sm:$0xff]
        %v408 = vld [vmem:[#allocation8 + $0x48] sm:$0xff]
        %v409 = vld [vmem:[#allocation8 + $0x50] sm:$0xff]
        %v410 = vld [vmem:[#allocation8 + $0x58] sm:$0xff]
        %v411 = vld [vmem:[#allocation8 + $0x60] sm:$0xff]
        %v412 = vld [vmem:[#allocation8 + $0x68] sm:$0xff]
        %v413 = vld [vmem:[#allocation8 + $0x70] sm:$0xff]
        %v414 = vld [vmem:[#allocation8 + $0x78] sm:$0xff]
        %v415 = vld [vmem:[#allocation2] sm:$0x3]
        %416 = vmatprep.subr.mxu0 0.0
        %417 = vmatpush1.msra.mxu0 %v414
        %418 = vmatprep.subr.mxu0 0.0
        %419 = vmatpush1.msra.mxu0 %v413
        %420 = vmatprep.subr.mxu0 0.0
        %421 = vmatpush1.msra.mxu0 %v412
        %422 = vmatprep.subr.mxu0 0.0
        %423 = vmatpush1.msra.mxu0 %v411
        %424 = vmatprep.subr.mxu0 0.0
        %425 = vmatpush1.msra.mxu0 %v410
        %426 = vmatprep.subr.mxu0 0.0
        %427 = vmatpush1.msra.mxu0 %v409
        %428 = vmatprep.subr.mxu0 0.0
        %429 = vmatpush1.msra.mxu0 %v408
        %430 = vmatprep.subr.mxu0 0.0
        %431 = vmatpush1.msra.mxu0 %v407
        %432 = vmatprep.subr.mxu0 0.0
        %433 = vmatpush1.msra.mxu0 %v406
        %434 = vmatprep.subr.mxu0 0.0
        %435 = vmatpush1.msra.mxu0 %v405
        %436 = vmatprep.subr.mxu0 0.0
        %437 = vmatpush1.msra.mxu0 %v404
        %438 = vmatprep.subr.mxu0 0.0
        %439 = vmatpush1.msra.mxu0 %v403
        %440 = vmatprep.subr.mxu0 0.0
        %441 = vmatpush1.msra.mxu0 %v402
        %442 = vmatprep.subr.mxu0 0.0
        %443 = vmatpush1.msra.mxu0 %v401
        %444 = vmatprep.subr.mxu0 0.0
        %445 = vmatpush1.msra.mxu0 %v400
        %446 = vmatprep.subr.mxu0 0.0
        %447 = vmatpush1.msra.mxu0 %v399
        %448 = vmatprep.subr.mxu0 0.0
        %449 = vmatpush2.msra.mxu0 0.0
        %450 = vmatprep.subr.mxu0 0.0
        %451 = vmatpush2.msra.mxu0 0.0
        %452 = vmatprep.subr.mxu0 0.0
        %453 = vmatpush2.msra.mxu0 0.0
        %454 = vmatprep.subr.mxu0 0.0
        %455 = vmatpush2.msra.mxu0 0.0
        %456 = vmatprep.subr.mxu0 0.0
        %457 = vmatpush2.msra.mxu0 0.0
        %458 = vmatprep.subr.mxu0 0.0
        %459 = vmatpush2.msra.mxu0 0.0
        %460 = vmatprep.subr.mxu0 0.0
        %461 = vmatpush2.msra.mxu0 0.0
        %462 = vmatprep.subr.mxu0 0.0
        %463 = vmatpush2.msra.mxu0 0.0
        %464 = vmatprep.subr.mxu0 0.0
        %465 = vmatpush2.msra.mxu0 0.0
        %466 = vmatprep.subr.mxu0 0.0
        %467 = vmatpush2.msra.mxu0 0.0
        %468 = vmatprep.subr.mxu0 0.0
        %469 = vmatpush2.msra.mxu0 0.0
        %470 = vmatprep.subr.mxu0 0.0
        %471 = vmatpush2.msra.mxu0 0.0
        %472 = vmatprep.subr.mxu0 0.0
        %473 = vmatpush2.msra.mxu0 0.0
        %474 = vmatprep.subr.mxu0 0.0
        %475 = vmatpush2.msra.mxu0 0.0
        %476 = vmatprep.subr.mxu0 0.0
        %477 = vmatpush2.msra.mxu0 0.0
        %478 = vmatprep.subr.mxu0 0.0
        %479 = vmatpush2.msra.mxu0 0.0
        %480 = vmatprep.mubr.f32.mxu0 0.0
        %481 = vmatmul.mubr.f32.gmra.mxu0 %v415
        %v482 = vpop.f32.mrf.mxu0
        %v483 = vadd.f32 0.0, %v482
        %v484 = vpop.f32.mrf.mxu0
        %485 = vdwg.mxu0
        %v487 = vrot.slane %v483, 1
        %v490 = vadd.f32 %v391, %v483
        %v491 = vadd.f32 %v396, %v487
        %v492 = vtanh.pop %v490
        %v493 = vtanh.pop %v491
        %v496 = vrot.slane %v493, 7
        %vm497 = vcmask 1041409
        %v498 = vsel %vm497, %v496, %v492
        %500 = vmatprep.subr.mxu0 0.0
        %501 = vmatpush1.msra.mxu0 %v414
        %502 = vmatprep.subr.mxu0 0.0
        %503 = vmatpush1.msra.mxu0 %v413
        %504 = vmatprep.subr.mxu0 0.0
        %505 = vmatpush1.msra.mxu0 %v412
        %506 = vmatprep.subr.mxu0 0.0
        %507 = vmatpush1.msra.mxu0 %v411
        %508 = vmatprep.subr.mxu0 0.0
        %509 = vmatpush1.msra.mxu0 %v410
        %510 = vmatprep.subr.mxu0 0.0
        %511 = vmatpush1.msra.mxu0 %v409
        %512 = vmatprep.subr.mxu0 0.0
        %513 = vmatpush1.msra.mxu0 %v408
        %514 = vmatprep.subr.mxu0 0.0
        %515 = vmatpush1.msra.mxu0 %v407
        %516 = vmatprep.subr.mxu0 0.0
        %517 = vmatpush1.msra.mxu0 %v406
        %518 = vmatprep.subr.mxu0 0.0
        %519 = vmatpush1.msra.mxu0 %v405
        %520 = vmatprep.subr.mxu0 0.0
        %521 = vmatpush1.msra.mxu0 %v404
        %522 = vmatprep.subr.mxu0 0.0
        %523 = vmatpush1.msra.mxu0 %v403
        %524 = vmatprep.subr.mxu0 0.0
        %525 = vmatpush1.msra.mxu0 %v402
        %526 = vmatprep.subr.mxu0 0.0
        %527 = vmatpush1.msra.mxu0 %v401
        %528 = vmatprep.subr.mxu0 0.0
        %529 = vmatpush1.msra.mxu0 %v400
        %530 = vmatprep.subr.mxu0 0.0
        %531 = vmatpush1.msra.mxu0 %v399
        %532 = vmatprep.subr.mxu0 0.0
        %533 = vmatpush2.msra.mxu0 0.0
        %534 = vmatprep.subr.mxu0 0.0
        %535 = vmatpush2.msra.mxu0 0.0
        %536 = vmatprep.subr.mxu0 0.0
        %537 = vmatpush2.msra.mxu0 0.0
        %538 = vmatprep.subr.mxu0 0.0
        %539 = vmatpush2.msra.mxu0 0.0
        %540 = vmatprep.subr.mxu0 0.0
        %541 = vmatpush2.msra.mxu0 0.0
        %542 = vmatprep.subr.mxu0 0.0
        %543 = vmatpush2.msra.mxu0 0.0
        %544 = vmatprep.subr.mxu0 0.0
        %545 = vmatpush2.msra.mxu0 0.0
        %546 = vmatprep.subr.mxu0 0.0
        %547 = vmatpush2.msra.mxu0 0.0
        %548 = vmatprep.subr.mxu0 0.0
        %549 = vmatpush2.msra.mxu0 0.0
        %550 = vmatprep.subr.mxu0 0.0
        %551 = vmatpush2.msra.mxu0 0.0
        %552 = vmatprep.subr.mxu0 0.0
        %553 = vmatpush2.msra.mxu0 0.0
        %554 = vmatprep.subr.mxu0 0.0
        %555 = vmatpush2.msra.mxu0 0.0
        %556 = vmatprep.subr.mxu0 0.0
        %557 = vmatpush2.msra.mxu0 0.0
        %558 = vmatprep.subr.mxu0 0.0
        %559 = vmatpush2.msra.mxu0 0.0
        %560 = vmatprep.subr.mxu0 0.0
        %561 = vmatpush2.msra.mxu0 0.0
        %562 = vmatprep.subr.mxu0 0.0
        %563 = vmatpush2.msra.mxu0 0.0
        %564 = vmatprep.mubr.f32.mxu0 0.0
        %565 = vmatmul.mubr.f32.gmra.mxu0 %v498
        %v566 = vpop.f32.mrf.mxu0
        %v567 = vadd.f32 0.0, %v566
        %v568 = vpop.f32.mrf.mxu0
        %569 = vdwg.mxu0
        %v571 = vrot.slane %v567, 7
        %v574 = vadd.f32 %v391, %v571
        %v575 = vadd.f32 %v396, %v567
        %v576 = vtanh.pop %v574
        %v577 = vtanh.pop %v575
        %v580 = vrot.slane %v576, 1
        %v581 = vsel %vm497, %v577, %v580
        %583 = vmatprep.subr.mxu0 0.0
        %584 = vmatpush1.msra.mxu0 %v414
        %585 = vmatprep.subr.mxu0 0.0
        %586 = vmatpush1.msra.mxu0 %v413
        %587 = vmatprep.subr.mxu0 0.0
        %588 = vmatpush1.msra.mxu0 %v412
        %589 = vmatprep.subr.mxu0 0.0
        %590 = vmatpush1.msra.mxu0 %v411
        %591 = vmatprep.subr.mxu0 0.0
        %592 = vmatpush1.msra.mxu0 %v410
        %593 = vmatprep.subr.mxu0 0.0
        %594 = vmatpush1.msra.mxu0 %v409
        %595 = vmatprep.subr.mxu0 0.0
        %596 = vmatpush1.msra.mxu0 %v408
        %597 = vmatprep.subr.mxu0 0.0
        %598 = vmatpush1.msra.mxu0 %v407
        %599 = vmatprep.subr.mxu0 0.0
        %600 = vmatpush1.msra.mxu0 %v406
        %601 = vmatprep.subr.mxu0 0.0
        %602 = vmatpush1.msra.mxu0 %v405
        %603 = vmatprep.subr.mxu0 0.0
        %604 = vmatpush1.msra.mxu0 %v404
        %605 = vmatprep.subr.mxu0 0.0
        %606 = vmatpush1.msra.mxu0 %v403
        %607 = vmatprep.subr.mxu0 0.0
        %608 = vmatpush1.msra.mxu0 %v402
        %609 = vmatprep.subr.mxu0 0.0
        %610 = vmatpush1.msra.mxu0 %v401
        %611 = vmatprep.subr.mxu0 0.0
        %612 = vmatpush1.msra.mxu0 %v400
        %613 = vmatprep.subr.mxu0 0.0
        %614 = vmatpush1.msra.mxu0 %v399
        %615 = vmatprep.subr.mxu0 0.0
        %616 = vmatpush2.msra.mxu0 0.0
        %617 = vmatprep.subr.mxu0 0.0
        %618 = vmatpush2.msra.mxu0 0.0
        %619 = vmatprep.subr.mxu0 0.0
        %620 = vmatpush2.msra.mxu0 0.0
        %621 = vmatprep.subr.mxu0 0.0
        %622 = vmatpush2.msra.mxu0 0.0
        %623 = vmatprep.subr.mxu0 0.0
        %624 = vmatpush2.msra.mxu0 0.0
        %625 = vmatprep.subr.mxu0 0.0
        %626 = vmatpush2.msra.mxu0 0.0
        %627 = vmatprep.subr.mxu0 0.0
        %628 = vmatpush2.msra.mxu0 0.0
        %629 = vmatprep.subr.mxu0 0.0
        %630 = vmatpush2.msra.mxu0 0.0
        %631 = vmatprep.subr.mxu0 0.0
        %632 = vmatpush2.msra.mxu0 0.0
        %633 = vmatprep.subr.mxu0 0.0
        %634 = vmatpush2.msra.mxu0 0.0
        %635 = vmatprep.subr.mxu0 0.0
        %636 = vmatpush2.msra.mxu0 0.0
        %637 = vmatprep.subr.mxu0 0.0
        %638 = vmatpush2.msra.mxu0 0.0
        %639 = vmatprep.subr.mxu0 0.0
        %640 = vmatpush2.msra.mxu0 0.0
        %641 = vmatprep.subr.mxu0 0.0
        %642 = vmatpush2.msra.mxu0 0.0
        %643 = vmatprep.subr.mxu0 0.0
        %644 = vmatpush2.msra.mxu0 0.0
        %645 = vmatprep.subr.mxu0 0.0
        %646 = vmatpush2.msra.mxu0 0.0
        %647 = vmatprep.mubr.f32.mxu0 0.0
        %648 = vmatmul.mubr.f32.gmra.mxu0 %v581
        %v649 = vpop.f32.mrf.mxu0
        %v650 = vadd.f32 0.0, %v649
        %v651 = vpop.f32.mrf.mxu0
        %652 = vdwg.mxu0
        %v654 = vrot.slane %v650, 6
        %v655 = vrot.slane %v650, 7
        %v658 = vadd.f32 %v391, %v654
        %v659 = vadd.f32 %v396, %v655
        %v660 = vtanh.pop %v658
        %v661 = vtanh.pop %v659
        %v664 = vrot.slane %v660, 2
        %v665 = vrot.slane %v661, 1
        %v666 = vsel %vm497, %v665, %v664
        %668 = vmatprep.subr.mxu0 0.0
        %669 = vmatpush1.msra.mxu0 %v414
        %670 = vmatprep.subr.mxu0 0.0
        %671 = vmatpush1.msra.mxu0 %v413
        %672 = vmatprep.subr.mxu0 0.0
        %673 = vmatpush1.msra.mxu0 %v412
        %674 = vmatprep.subr.mxu0 0.0
        %675 = vmatpush1.msra.mxu0 %v411
        %676 = vmatprep.subr.mxu0 0.0
        %677 = vmatpush1.msra.mxu0 %v410
        %678 = vmatprep.subr.mxu0 0.0
        %679 = vmatpush1.msra.mxu0 %v409
        %680 = vmatprep.subr.mxu0 0.0
        %681 = vmatpush1.msra.mxu0 %v408
        %682 = vmatprep.subr.mxu0 0.0
        %683 = vmatpush1.msra.mxu0 %v407
        %684 = vmatprep.subr.mxu0 0.0
        %685 = vmatpush1.msra.mxu0 %v406
        %686 = vmatprep.subr.mxu0 0.0
        %687 = vmatpush1.msra.mxu0 %v405
        %688 = vmatprep.subr.mxu0 0.0
        %689 = vmatpush1.msra.mxu0 %v404
        %690 = vmatprep.subr.mxu0 0.0
        %691 = vmatpush1.msra.mxu0 %v403
        %692 = vmatprep.subr.mxu0 0.0
        %693 = vmatpush1.msra.mxu0 %v402
        %694 = vmatprep.subr.mxu0 0.0
        %695 = vmatpush1.msra.mxu0 %v401
        %696 = vmatprep.subr.mxu0 0.0
        %697 = vmatpush1.msra.mxu0 %v400
        %698 = vmatprep.subr.mxu0 0.0
        %699 = vmatpush1.msra.mxu0 %v399
        %700 = vmatprep.subr.mxu0 0.0
        %701 = vmatpush2.msra.mxu0 0.0
        %702 = vmatprep.subr.mxu0 0.0
        %703 = vmatpush2.msra.mxu0 0.0
        %704 = vmatprep.subr.mxu0 0.0
        %705 = vmatpush2.msra.mxu0 0.0
        %706 = vmatprep.subr.mxu0 0.0
        %707 = vmatpush2.msra.mxu0 0.0
        %708 = vmatprep.subr.mxu0 0.0
        %709 = vmatpush2.msra.mxu0 0.0
        %710 = vmatprep.subr.mxu0 0.0
        %711 = vmatpush2.msra.mxu0 0.0
        %712 = vmatprep.subr.mxu0 0.0
        %713 = vmatpush2.msra.mxu0 0.0
        %714 = vmatprep.subr.mxu0 0.0
        %715 = vmatpush2.msra.mxu0 0.0
        %716 = vmatprep.subr.mxu0 0.0
        %717 = vmatpush2.msra.mxu0 0.0
        %718 = vmatprep.subr.mxu0 0.0
        %719 = vmatpush2.msra.mxu0 0.0
        %720 = vmatprep.subr.mxu0 0.0
        %721 = vmatpush2.msra.mxu0 0.0
        %722 = vmatprep.subr.mxu0 0.0
        %723 = vmatpush2.msra.mxu0 0.0
        %724 = vmatprep.subr.mxu0 0.0
        %725 = vmatpush2.msra.mxu0 0.0
        %726 = vmatprep.subr.mxu0 0.0
        %727 = vmatpush2.msra.mxu0 0.0
        %728 = vmatprep.subr.mxu0 0.0
        %729 = vmatpush2.msra.mxu0 0.0
        %730 = vmatprep.subr.mxu0 0.0
        %731 = vmatpush2.msra.mxu0 0.0
        %732 = vmatprep.mubr.f32.mxu0 0.0
        %733 = vmatmul.mubr.f32.gmra.mxu0 %v666
        %v734 = vpop.f32.mrf.mxu0
        %v735 = vadd.f32 0.0, %v734
        %v736 = vpop.f32.mrf.mxu0
        %737 = vdwg.mxu0
        %v739 = vrot.slane %v735, 5
        %v740 = vrot.slane %v735, 6
        %v743 = vadd.f32 %v391, %v739
        %v744 = vadd.f32 %v396, %v740
        %v745 = vtanh.pop %v743
        %v746 = vtanh.pop %v744
        %v749 = vrot.slane %v745, 3
        %v750 = vrot.slane %v746, 2
        %v751 = vsel %vm497, %v750, %v749
        %753 = vmatprep.subr.mxu0 0.0
        %754 = vmatpush1.msra.mxu0 %v414
        %755 = vmatprep.subr.mxu0 0.0
        %756 = vmatpush1.msra.mxu0 %v413
        %757 = vmatprep.subr.mxu0 0.0
        %758 = vmatpush1.msra.mxu0 %v412
        %759 = vmatprep.subr.mxu0 0.0
        %760 = vmatpush1.msra.mxu0 %v411
        %761 = vmatprep.subr.mxu0 0.0
        %762 = vmatpush1.msra.mxu0 %v410
        %763 = vmatprep.subr.mxu0 0.0
        %764 = vmatpush1.msra.mxu0 %v409
        %765 = vmatprep.subr.mxu0 0.0
        %766 = vmatpush1.msra.mxu0 %v408
        %767 = vmatprep.subr.mxu0 0.0
        %768 = vmatpush1.msra.mxu0 %v407
        %769 = vmatprep.subr.mxu0 0.0
        %770 = vmatpush1.msra.mxu0 %v406
        %771 = vmatprep.subr.mxu0 0.0
        %772 = vmatpush1.msra.mxu0 %v405
        %773 = vmatprep.subr.mxu0 0.0
        %774 = vmatpush1.msra.mxu0 %v404
        %775 = vmatprep.subr.mxu0 0.0
        %776 = vmatpush1.msra.mxu0 %v403
        %777 = vmatprep.subr.mxu0 0.0
        %778 = vmatpush1.msra.mxu0 %v402
        %779 = vmatprep.subr.mxu0 0.0
        %780 = vmatpush1.msra.mxu0 %v401
        %781 = vmatprep.subr.mxu0 0.0
        %782 = vmatpush1.msra.mxu0 %v400
        %783 = vmatprep.subr.mxu0 0.0
        %784 = vmatpush1.msra.mxu0 %v399
        %785 = vmatprep.subr.mxu0 0.0
        %786 = vmatpush2.msra.mxu0 0.0
        %787 = vmatprep.subr.mxu0 0.0
        %788 = vmatpush2.msra.mxu0 0.0
        %789 = vmatprep.subr.mxu0 0.0
        %790 = vmatpush2.msra.mxu0 0.0
        %791 = vmatprep.subr.mxu0 0.0
        %792 = vmatpush2.msra.mxu0 0.0
        %793 = vmatprep.subr.mxu0 0.0
        %794 = vmatpush2.msra.mxu0 0.0
        %795 = vmatprep.subr.mxu0 0.0
        %796 = vmatpush2.msra.mxu0 0.0
        %797 = vmatprep.subr.mxu0 0.0
        %798 = vmatpush2.msra.mxu0 0.0
        %799 = vmatprep.subr.mxu0 0.0
        %800 = vmatpush2.msra.mxu0 0.0
        %801 = vmatprep.subr.mxu0 0.0
        %802 = vmatpush2.msra.mxu0 0.0
        %803 = vmatprep.subr.mxu0 0.0
        %804 = vmatpush2.msra.mxu0 0.0
        %805 = vmatprep.subr.mxu0 0.0
        %806 = vmatpush2.msra.mxu0 0.0
        %807 = vmatprep.subr.mxu0 0.0
        %808 = vmatpush2.msra.mxu0 0.0
        %809 = vmatprep.subr.mxu0 0.0
        %810 = vmatpush2.msra.mxu0 0.0
        %811 = vmatprep.subr.mxu0 0.0
        %812 = vmatpush2.msra.mxu0 0.0
        %813 = vmatprep.subr.mxu0 0.0
        %814 = vmatpush2.msra.mxu0 0.0
        %815 = vmatprep.subr.mxu0 0.0
        %816 = vmatpush2.msra.mxu0 0.0
        %817 = vmatprep.mubr.f32.mxu0 0.0
        %818 = vmatmul.mubr.f32.gmra.mxu0 %v751
        %v819 = vpop.f32.mrf.mxu0
        %v820 = vadd.f32 0.0, %v819
        %v821 = vpop.f32.mrf.mxu0
        %822 = vdwg.mxu0
        %v824 = vrot.slane %v820, 4
        %v825 = vrot.slane %v820, 5
        %v828 = vadd.f32 %v391, %v824
        %v829 = vadd.f32 %v396, %v825
        %v830 = vtanh.pop %v828
        %v831 = vtanh.pop %v829
        %v834 = vrot.slane %v830, 4
        %v835 = vrot.slane %v831, 3
        %v836 = vsel %vm497, %v835, %v834
        %838 = vmatprep.subr.mxu0 0.0
        %839 = vmatpush1.msra.mxu0 %v414
        %840 = vmatprep.subr.mxu0 0.0
        %841 = vmatpush1.msra.mxu0 %v413
        %842 = vmatprep.subr.mxu0 0.0
        %843 = vmatpush1.msra.mxu0 %v412
        %844 = vmatprep.subr.mxu0 0.0
        %845 = vmatpush1.msra.mxu0 %v411
        %846 = vmatprep.subr.mxu0 0.0
        %847 = vmatpush1.msra.mxu0 %v410
        %848 = vmatprep.subr.mxu0 0.0
        %849 = vmatpush1.msra.mxu0 %v409
        %850 = vmatprep.subr.mxu0 0.0
        %851 = vmatpush1.msra.mxu0 %v408
        %852 = vmatprep.subr.mxu0 0.0
        %853 = vmatpush1.msra.mxu0 %v407
        %854 = vmatprep.subr.mxu0 0.0
        %855 = vmatpush1.msra.mxu0 %v406
        %856 = vmatprep.subr.mxu0 0.0
        %857 = vmatpush1.msra.mxu0 %v405
        %858 = vmatprep.subr.mxu0 0.0
        %859 = vmatpush1.msra.mxu0 %v404
        %860 = vmatprep.subr.mxu0 0.0
        %861 = vmatpush1.msra.mxu0 %v403
        %862 = vmatprep.subr.mxu0 0.0
        %863 = vmatpush1.msra.mxu0 %v402
        %864 = vmatprep.subr.mxu0 0.0
        %865 = vmatpush1.msra.mxu0 %v401
        %866 = vmatprep.subr.mxu0 0.0
        %867 = vmatpush1.msra.mxu0 %v400
        %868 = vmatprep.subr.mxu0 0.0
        %869 = vmatpush1.msra.mxu0 %v399
        %870 = vmatprep.subr.mxu0 0.0
        %871 = vmatpush2.msra.mxu0 0.0
        %872 = vmatprep.subr.mxu0 0.0
        %873 = vmatpush2.msra.mxu0 0.0
        %874 = vmatprep.subr.mxu0 0.0
        %875 = vmatpush2.msra.mxu0 0.0
        %876 = vmatprep.subr.mxu0 0.0
        %877 = vmatpush2.msra.mxu0 0.0
        %878 = vmatprep.subr.mxu0 0.0
        %879 = vmatpush2.msra.mxu0 0.0
        %880 = vmatprep.subr.mxu0 0.0
        %881 = vmatpush2.msra.mxu0 0.0
        %882 = vmatprep.subr.mxu0 0.0
        %883 = vmatpush2.msra.mxu0 0.0
        %884 = vmatprep.subr.mxu0 0.0
        %885 = vmatpush2.msra.mxu0 0.0
        %886 = vmatprep.subr.mxu0 0.0
        %887 = vmatpush2.msra.mxu0 0.0
        %888 = vmatprep.subr.mxu0 0.0
        %889 = vmatpush2.msra.mxu0 0.0
        %890 = vmatprep.subr.mxu0 0.0
        %891 = vmatpush2.msra.mxu0 0.0
        %892 = vmatprep.subr.mxu0 0.0
        %893 = vmatpush2.msra.mxu0 0.0
        %894 = vmatprep.subr.mxu0 0.0
        %895 = vmatpush2.msra.mxu0 0.0
        %896 = vmatprep.subr.mxu0 0.0
        %897 = vmatpush2.msra.mxu0 0.0
        %898 = vmatprep.subr.mxu0 0.0
        %899 = vmatpush2.msra.mxu0 0.0
        %900 = vmatprep.subr.mxu0 0.0
        %901 = vmatpush2.msra.mxu0 0.0
        %902 = vmatprep.mubr.f32.mxu0 0.0
        %903 = vmatmul.mubr.f32.gmra.mxu0 %v836
        %v904 = vpop.f32.mrf.mxu0
        %v905 = vadd.f32 0.0, %v904
        %v906 = vpop.f32.mrf.mxu0
        %907 = vdwg.mxu0
        %v909 = vrot.slane %v905, 3
        %v910 = vrot.slane %v905, 4
        %v913 = vadd.f32 %v391, %v909
        %v914 = vadd.f32 %v396, %v910
        %v915 = vtanh.pop %v913
        %v916 = vtanh.pop %v914
        %v919 = vrot.slane %v915, 5
        %v920 = vrot.slane %v916, 4
        %v921 = vsel %vm497, %v920, %v919
        %923 = vmatprep.subr.mxu0 0.0
        %924 = vmatpush1.msra.mxu0 %v414
        %925 = vmatprep.subr.mxu0 0.0
        %926 = vmatpush1.msra.mxu0 %v413
        %927 = vmatprep.subr.mxu0 0.0
        %928 = vmatpush1.msra.mxu0 %v412
        %929 = vmatprep.subr.mxu0 0.0
        %930 = vmatpush1.msra.mxu0 %v411
        %931 = vmatprep.subr.mxu0 0.0
        %932 = vmatpush1.msra.mxu0 %v410
        %933 = vmatprep.subr.mxu0 0.0
        %934 = vmatpush1.msra.mxu0 %v409
        %935 = vmatprep.subr.mxu0 0.0
        %936 = vmatpush1.msra.mxu0 %v408
        %937 = vmatprep.subr.mxu0 0.0
        %938 = vmatpush1.msra.mxu0 %v407
        %939 = vmatprep.subr.mxu0 0.0
        %940 = vmatpush1.msra.mxu0 %v406
        %941 = vmatprep.subr.mxu0 0.0
        %942 = vmatpush1.msra.mxu0 %v405
        %943 = vmatprep.subr.mxu0 0.0
        %944 = vmatpush1.msra.mxu0 %v404
        %945 = vmatprep.subr.mxu0 0.0
        %946 = vmatpush1.msra.mxu0 %v403
        %947 = vmatprep.subr.mxu0 0.0
        %948 = vmatpush1.msra.mxu0 %v402
        %949 = vmatprep.subr.mxu0 0.0
        %950 = vmatpush1.msra.mxu0 %v401
        %951 = vmatprep.subr.mxu0 0.0
        %952 = vmatpush1.msra.mxu0 %v400
        %953 = vmatprep.subr.mxu0 0.0
        %954 = vmatpush1.msra.mxu0 %v399
        %955 = vmatprep.subr.mxu0 0.0
        %956 = vmatpush2.msra.mxu0 0.0
        %957 = vmatprep.subr.mxu0 0.0
        %958 = vmatpush2.msra.mxu0 0.0
        %959 = vmatprep.subr.mxu0 0.0
        %960 = vmatpush2.msra.mxu0 0.0
        %961 = vmatprep.subr.mxu0 0.0
        %962 = vmatpush2.msra.mxu0 0.0
        %963 = vmatprep.subr.mxu0 0.0
        %964 = vmatpush2.msra.mxu0 0.0
        %965 = vmatprep.subr.mxu0 0.0
        %966 = vmatpush2.msra.mxu0 0.0
        %967 = vmatprep.subr.mxu0 0.0
        %968 = vmatpush2.msra.mxu0 0.0
        %969 = vmatprep.subr.mxu0 0.0
        %970 = vmatpush2.msra.mxu0 0.0
        %971 = vmatprep.subr.mxu0 0.0
        %972 = vmatpush2.msra.mxu0 0.0
        %973 = vmatprep.subr.mxu0 0.0
        %974 = vmatpush2.msra.mxu0 0.0
        %975 = vmatprep.subr.mxu0 0.0
        %976 = vmatpush2.msra.mxu0 0.0
        %977 = vmatprep.subr.mxu0 0.0
        %978 = vmatpush2.msra.mxu0 0.0
        %979 = vmatprep.subr.mxu0 0.0
        %980 = vmatpush2.msra.mxu0 0.0
        %981 = vmatprep.subr.mxu0 0.0
        %982 = vmatpush2.msra.mxu0 0.0
        %983 = vmatprep.subr.mxu0 0.0
        %984 = vmatpush2.msra.mxu0 0.0
        %985 = vmatprep.subr.mxu0 0.0
        %986 = vmatpush2.msra.mxu0 0.0
        %987 = vmatprep.mubr.f32.mxu0 0.0
        %988 = vmatmul.mubr.f32.gmra.mxu0 %v921
        %v989 = vpop.f32.mrf.mxu0
        %v990 = vadd.f32 0.0, %v989
        %v991 = vpop.f32.mrf.mxu0
        %992 = vdwg.mxu0
        %v994 = vrot.slane %v990, 2
        %v995 = vrot.slane %v990, 3
        %v998 = vadd.f32 %v391, %v994
        %v999 = vadd.f32 %v396, %v995
        %v1000 = vtanh.pop %v998
        %v1001 = vtanh.pop %v999
        %v1004 = vrot.slane %v1000, 6
        %v1005 = vrot.slane %v1001, 5
        %v1006 = vsel %vm497, %v1005, %v1004
        %1008 = vmatprep.subr.mxu0 0.0
        %1009 = vmatpush1.msra.mxu0 %v414
        %1010 = vmatprep.subr.mxu0 0.0
        %1011 = vmatpush1.msra.mxu0 %v413
        %1012 = vmatprep.subr.mxu0 0.0
        %1013 = vmatpush1.msra.mxu0 %v412
        %1014 = vmatprep.subr.mxu0 0.0
        %1015 = vmatpush1.msra.mxu0 %v411
        %1016 = vmatprep.subr.mxu0 0.0
        %1017 = vmatpush1.msra.mxu0 %v410
        %1018 = vmatprep.subr.mxu0 0.0
        %1019 = vmatpush1.msra.mxu0 %v409
        %1020 = vmatprep.subr.mxu0 0.0
        %1021 = vmatpush1.msra.mxu0 %v408
        %1022 = vmatprep.subr.mxu0 0.0
        %1023 = vmatpush1.msra.mxu0 %v407
        %1024 = vmatprep.subr.mxu0 0.0
        %1025 = vmatpush1.msra.mxu0 %v406
        %1026 = vmatprep.subr.mxu0 0.0
        %1027 = vmatpush1.msra.mxu0 %v405
        %1028 = vmatprep.subr.mxu0 0.0
        %1029 = vmatpush1.msra.mxu0 %v404
        %1030 = vmatprep.subr.mxu0 0.0
        %1031 = vmatpush1.msra.mxu0 %v403
        %1032 = vmatprep.subr.mxu0 0.0
        %1033 = vmatpush1.msra.mxu0 %v402
        %1034 = vmatprep.subr.mxu0 0.0
        %1035 = vmatpush1.msra.mxu0 %v401
        %1036 = vmatprep.subr.mxu0 0.0
        %1037 = vmatpush1.msra.mxu0 %v400
        %1038 = vmatprep.subr.mxu0 0.0
        %1039 = vmatpush1.msra.mxu0 %v399
        %1040 = vmatprep.subr.mxu0 0.0
        %1041 = vmatpush2.msra.mxu0 0.0
        %1042 = vmatprep.subr.mxu0 0.0
        %1043 = vmatpush2.msra.mxu0 0.0
        %1044 = vmatprep.subr.mxu0 0.0
        %1045 = vmatpush2.msra.mxu0 0.0
        %1046 = vmatprep.subr.mxu0 0.0
        %1047 = vmatpush2.msra.mxu0 0.0
        %1048 = vmatprep.subr.mxu0 0.0
        %1049 = vmatpush2.msra.mxu0 0.0
        %1050 = vmatprep.subr.mxu0 0.0
        %1051 = vmatpush2.msra.mxu0 0.0
        %1052 = vmatprep.subr.mxu0 0.0
        %1053 = vmatpush2.msra.mxu0 0.0
        %1054 = vmatprep.subr.mxu0 0.0
        %1055 = vmatpush2.msra.mxu0 0.0
        %1056 = vmatprep.subr.mxu0 0.0
        %1057 = vmatpush2.msra.mxu0 0.0
        %1058 = vmatprep.subr.mxu0 0.0
        %1059 = vmatpush2.msra.mxu0 0.0
        %1060 = vmatprep.subr.mxu0 0.0
        %1061 = vmatpush2.msra.mxu0 0.0
        %1062 = vmatprep.subr.mxu0 0.0
        %1063 = vmatpush2.msra.mxu0 0.0
        %1064 = vmatprep.subr.mxu0 0.0
        %1065 = vmatpush2.msra.mxu0 0.0
        %1066 = vmatprep.subr.mxu0 0.0
        %1067 = vmatpush2.msra.mxu0 0.0
        %1068 = vmatprep.subr.mxu0 0.0
        %1069 = vmatpush2.msra.mxu0 0.0
        %1070 = vmatprep.subr.mxu0 0.0
        %1071 = vmatpush2.msra.mxu0 0.0
        %1072 = vmatprep.mubr.f32.mxu0 0.0
        %1073 = vmatmul.mubr.f32.gmra.mxu0 %v1006
        %v1074 = vpop.f32.mrf.mxu0
        %v1075 = vadd.f32 0.0, %v1074
        %v1076 = vpop.f32.mrf.mxu0
        %1077 = vdwg.mxu0
        %v1079 = vrot.slane %v1075, 1
        %v1080 = vrot.slane %v1075, 2
        %v1083 = vadd.f32 %v391, %v1079
        %v1084 = vadd.f32 %v396, %v1080
        %v1085 = vtanh.pop %v1083
        %v1086 = vtanh.pop %v1084
        %v1089 = vrot.slane %v1086, 7
        %1092 = vst [vmem:[#allocation2 - $0x7] sm:$0x80] %v1085
        %1093 = vst [vmem:[#allocation2 + $0x1] sm:$0x1] %v1089
        %p1094 = scmp.eq.s32.totalorder %s23, 1
        // Predicated region
        $region65: #{tpu_custom_call.1} parent=43 // pred_check
          %p1095 = pneg %p1094
        $region66: #{tpu_custom_call.1} parent=43 // pred_check_branch
          %1097 = sbr.rel (%p1095) target = $region68
        $region67: #{tpu_custom_call.1} parent=43 // pred_region
          %v1098 = vld [vmem:[#allocation9] sm:$0xff]
          %v1099 = vld [vmem:[#allocation9 + $0x8] sm:$0xff]
          %v1100 = vld [vmem:[#allocation9 + $0x10] sm:$0xff]
          %v1101 = vld [vmem:[#allocation9 + $0x18] sm:$0xff]
          %v1102 = vld [vmem:[#allocation9 + $0x20] sm:$0xff]
          %v1103 = vld [vmem:[#allocation9 + $0x28] sm:$0xff]
          %v1104 = vld [vmem:[#allocation9 + $0x30] sm:$0xff]
          %v1105 = vld [vmem:[#allocation9 + $0x38] sm:$0xff]
          %v1106 = vld [vmem:[#allocation9 + $0x40] sm:$0xff]
          %v1107 = vld [vmem:[#allocation9 + $0x48] sm:$0xff]
          %v1108 = vld [vmem:[#allocation9 + $0x50] sm:$0xff]
          %v1109 = vld [vmem:[#allocation9 + $0x58] sm:$0xff]
          %v1110 = vld [vmem:[#allocation9 + $0x60] sm:$0xff]
          %v1111 = vld [vmem:[#allocation9 + $0x68] sm:$0xff]
          %v1112 = vld [vmem:[#allocation9 + $0x70] sm:$0xff]
          %v1113 = vld [vmem:[#allocation9 + $0x78] sm:$0xff]
          %v1114 = vld [vmem:[%s5] sm:$0x1]
          %v1116 = vlaneseq
          %v1117 = vshrl.u32 %v1116, 7
          %v1118 = vsub.s32 0, %v1117
          %v1119 = vrot.slane %v1114, %v1118
          %v1121 = vrot.slane %v1085, 7
          %v1122 = vrot.slane %v1086, 6
          %v1123 = vsel %vm497, %v1122, %v1121
          %1125 = vmatprep.subr.mxu0 0.0
          %1126 = vmatpush1.msra.mxu0 %v1113
          %1127 = vmatprep.subr.mxu0 0.0
          %1128 = vmatpush1.msra.mxu0 %v1112
          %1129 = vmatprep.subr.mxu0 0.0
          %1130 = vmatpush1.msra.mxu0 %v1111
          %1131 = vmatprep.subr.mxu0 0.0
          %1132 = vmatpush1.msra.mxu0 %v1110
          %1133 = vmatprep.subr.mxu0 0.0
          %1134 = vmatpush1.msra.mxu0 %v1109
          %1135 = vmatprep.subr.mxu0 0.0
          %1136 = vmatpush1.msra.mxu0 %v1108
          %1137 = vmatprep.subr.mxu0 0.0
          %1138 = vmatpush1.msra.mxu0 %v1107
          %1139 = vmatprep.subr.mxu0 0.0
          %1140 = vmatpush1.msra.mxu0 %v1106
          %1141 = vmatprep.subr.mxu0 0.0
          %1142 = vmatpush1.msra.mxu0 %v1105
          %1143 = vmatprep.subr.mxu0 0.0
          %1144 = vmatpush1.msra.mxu0 %v1104
          %1145 = vmatprep.subr.mxu0 0.0
          %1146 = vmatpush1.msra.mxu0 %v1103
          %1147 = vmatprep.subr.mxu0 0.0
          %1148 = vmatpush1.msra.mxu0 %v1102
          %1149 = vmatprep.subr.mxu0 0.0
          %1150 = vmatpush1.msra.mxu0 %v1101
          %1151 = vmatprep.subr.mxu0 0.0
          %1152 = vmatpush1.msra.mxu0 %v1100
          %1153 = vmatprep.subr.mxu0 0.0
          %1154 = vmatpush1.msra.mxu0 %v1099
          %1155 = vmatprep.subr.mxu0 0.0
          %1156 = vmatpush1.msra.mxu0 %v1098
          %1157 = vmatprep.subr.mxu0 0.0
          %1158 = vmatpush2.msra.mxu0 0.0
          %1159 = vmatprep.subr.mxu0 0.0
          %1160 = vmatpush2.msra.mxu0 0.0
          %1161 = vmatprep.subr.mxu0 0.0
          %1162 = vmatpush2.msra.mxu0 0.0
          %1163 = vmatprep.subr.mxu0 0.0
          %1164 = vmatpush2.msra.mxu0 0.0
          %1165 = vmatprep.subr.mxu0 0.0
          %1166 = vmatpush2.msra.mxu0 0.0
          %1167 = vmatprep.subr.mxu0 0.0
          %1168 = vmatpush2.msra.mxu0 0.0
          %1169 = vmatprep.subr.mxu0 0.0
          %1170 = vmatpush2.msra.mxu0 0.0
          %1171 = vmatprep.subr.mxu0 0.0
          %1172 = vmatpush2.msra.mxu0 0.0
          %1173 = vmatprep.subr.mxu0 0.0
          %1174 = vmatpush2.msra.mxu0 0.0
          %1175 = vmatprep.subr.mxu0 0.0
          %1176 = vmatpush2.msra.mxu0 0.0
          %1177 = vmatprep.subr.mxu0 0.0
          %1178 = vmatpush2.msra.mxu0 0.0
          %1179 = vmatprep.subr.mxu0 0.0
          %1180 = vmatpush2.msra.mxu0 0.0
          %1181 = vmatprep.subr.mxu0 0.0
          %1182 = vmatpush2.msra.mxu0 0.0
          %1183 = vmatprep.subr.mxu0 0.0
          %1184 = vmatpush2.msra.mxu0 0.0
          %1185 = vmatprep.subr.mxu0 0.0
          %1186 = vmatpush2.msra.mxu0 0.0
          %1187 = vmatprep.subr.mxu0 0.0
          %1188 = vmatpush2.msra.mxu0 0.0
          %1189 = vmatprep.mubr.f32.mxu0 0.0
          %1190 = vmatmul.mubr.f32.gmra.mxu0 %v1123
          %v1191 = vpop.f32.mrf.mxu0
          %v1192 = vadd.f32 %v1119, %v1191
          %v1193 = vpop.f32.mrf.mxu0
          %1194 = vdwg.mxu0
          %1195 = vst [vmem:[#allocation11] sm:$0x3] %v1192
        $region68: #{tpu_custom_call.1} parent=43 // pred_fallthru
          _
        // Predicated region
        $region69: #{tpu_custom_call.1} parent=43 // pred_check
          %p1196 = pneg %p167
        $region70: #{tpu_custom_call.1} parent=43 // pred_check_branch
          %1198 = sbr.rel (%p1196) target = $region72
        $region71: #{tpu_custom_call.1} parent=43 // pred_region
          %s1200 = ssub.s32 32, 32
          %1201 = vsyncadd [#allocation5], %s1200
          %s1203 = sshll.u32 [#allocation11], 4
          %s1204 = int_to_ptr.vmem [resolvable:$true] %s1203
          %1206 = dma.vmem_to_hbm [thread:$0]  %s1204, 32, %s6, [#allocation5]
        $region72: #{tpu_custom_call.1} parent=43 // pred_fallthru
          _
        // Predicated region
        $region73: #{tpu_custom_call.1} parent=43 // pred_check
          %p1207 = pneg %p167
        $region74: #{tpu_custom_call.1} parent=43 // pred_check_branch
          %1209 = sbr.rel (%p1207) target = $region76
        $region75: #{tpu_custom_call.1} parent=43 // pred_region
          %1210 = dma.done [#allocation5], 32
        $region76: #{tpu_custom_call.1} parent=43 // pred_fallthru
          _
      $region44: #{tpu_custom_call.1} parent=5 // pred_fallthru
        _
      %p1211 = scmp.le.s32.totalorder 2, %s18
      // Predicated region
      $region77: #{tpu_custom_call.1} parent=5 // pred_check
        %p1212 = pneg %p1211
      $region78: #{tpu_custom_call.1} parent=5 // pred_check_branch
        %1214 = sbr.rel (%p1212) target = $region80
      $region79: #{tpu_custom_call.1} parent=5 // pred_region
        %s1215 = ssub.s32 %s18, 2
      $region80: #{tpu_custom_call.1} parent=5 // pred_fallthru
        _
    $region6: #{tpu_custom_call.1} parent=1 // loop_footer
      %s22 = sadd.s32 1, %s18
    $region7: #{tpu_custom_call.1} parent=1 // loop_footer_branch
      %17 = sbr.rel target = $region3
    $region8: #{tpu_custom_call.1} parent=1 // loop_exit
      _
    %1216 = vsyncpa [#allocation4], 1
    %s1217 = scalar_lea.sflag [#allocation4], 1
    %1218 = vsyncpa %s1217, 1
    %1219 = vsyncpa [#allocation7], 1
    %1220 = vsyncpa [#allocation10], 1
    %1221 = vsyncpa [#allocation5], 1
    %s1222 = scalar_lea.sflag [#allocation5], 1
    %1223 = vsyncpa %s1222, 1

</llo_original>
